<compile_context>
chip_gen: v7x
topology: tpu7x:2x2x1
jax: 0.10.0
libtpu: 0.0.40
codegen_flags: <defaults>
</compile_context>

<pallas_src>
import functools
import math

import jax
import jax.numpy as jnp
from jax.experimental import pallas as pl
from jax.experimental.pallas import tpu as pltpu


def _round_up(x, m):
    return (x + m - 1) // m * m


def _pick_tile(dim128, max_tile):
    """Largest multiple of 128 that divides `dim128` and is <= max_tile."""
    d = dim128 // 128
    t_max = max(1, max_tile // 128)
    for t in range(min(d, t_max), 0, -1):
        if d % t == 0:
            return t * 128
    return 128


def stable_softplus(x):
    # torch.nn.functional.softplus(x, beta=1, threshold=20)
    return jnp.where(x > 20.0, x, jnp.log1p(jnp.exp(jnp.minimum(x, 20.0))))


def _fused_linear_kernel(x_ref, wt_ref, scale_ref, bias_ref, o_ref):
    """Single-K-tile fast path: Y = (X @ W^T) * scale + bias in one shot.

    x_ref    : (TB, TK)  activation tile (compute dtype)
    wt_ref   : (TK, TN)  transposed weight tile, MXU-native (K, N) layout
    scale_ref: (1, TN)   per-output-feature Lipschitz scale (f32)
    bias_ref : (1, TN)   bias (f32)
    o_ref    : (TB, TN)  output tile
    """
    y = jax.lax.dot_general(
        x_ref[...], wt_ref[...],
        dimension_numbers=(((1,), (0,)), ((), ())),
        preferred_element_type=jnp.float32,
    )
    o_ref[...] = (y * scale_ref[...] + bias_ref[...]).astype(o_ref.dtype)


def _fused_linear_acc_kernel(x_ref, wt_ref, scale_ref, bias_ref, o_ref, acc_ref):
    """K-tiled path: f32 accumulator + fused scale/bias epilogue on last K step."""
    k = pl.program_id(2)

    @pl.when(k == 0)
    def _():
        acc_ref[...] = jnp.zeros_like(acc_ref)

    acc_ref[...] += jax.lax.dot_general(
        x_ref[...], wt_ref[...],
        dimension_numbers=(((1,), (0,)), ((), ())),
        preferred_element_type=jnp.float32,
    )

    @pl.when(k == pl.num_programs(2) - 1)
    def _():
        o_ref[...] = (acc_ref[...] * scale_ref[...] + bias_ref[...]
                      ).astype(o_ref.dtype)


@functools.partial(jax.jit, static_argnames=("compute_dtype", "batch_tile"))
def stable_softplus_lipschitz_linear(x, weight, bias, c, *,
                                     compute_dtype=jnp.float32,
                                     batch_tile=None):
    """Flatten leading dims, run the tiled Pallas GEMM kernel, reshape back."""
    out_features, in_features = weight.shape
    lead = x.shape[:-1]
    x2 = x.reshape(-1, in_features)
    B = x2.shape[0]
    out_dtype = x.dtype

    # ---- prologue (hoisted out of the per-tile kernel): Lipschitz scale ----
    w32 = weight.astype(jnp.float32)
    lip = stable_softplus(c.astype(jnp.float32).reshape(()))
    row_abs_sum = jnp.sum(jnp.abs(w32), axis=1)                  # (out,)
    scale = jnp.minimum(lip / (row_abs_sum + 1e-8), 1.0)         # clamp(max=1.0)

    c_item = jnp.dtype(compute_dtype).itemsize
    o_item = jnp.dtype(out_dtype).itemsize

    # ---- tile selection: (8,128)-aligned, divides the 128-padded feature dims,
    #      and fits a conservative VMEM budget (safe on v7x's 64 MiB VMEM). ----
    K_pad = _round_up(in_features, 128)
    N_pad = _round_up(out_features, 128)
    if batch_tile is not None:
        TB = _round_up(max(batch_tile, 8), 8)
    else:
        TB = min(_round_up(max(B, 1), 8), 256)
    TK = _pick_tile(K_pad, 2048)
    TN = _pick_tile(N_pad, 512)

    budget = 32 * 1024 * 1024

    def _vmem_est(tb, tk, tn):
        # double-buffered x / wt / out tiles + scale/bias vectors + f32 acc.
        return (2 * tb * tk * c_item + 2 * tk * tn * c_item
                + 2 * tb * tn * o_item + 4 * tn * 4 + tb * tn * 4)

    while _vmem_est(TB, TK, TN) > budget:
        if TK > 128:
            TK = _pick_tile(K_pad, TK // 2)
        elif TN > 128:
            TN = _pick_tile(N_pad, TN // 2)
        elif TB > 8:
            TB = max(8, _round_up(TB // 2, 8))
        else:
            break

    B_pad = _round_up(max(B, 1), TB)
    n_k = K_pad // TK
    grid = (B_pad // TB, N_pad // TN, n_k)

    # ---- pad operands to tile-aligned, lane-dense layouts ----
    x_p = jnp.pad(x2.astype(compute_dtype),
                  ((0, B_pad - B), (0, K_pad - in_features)))
    wt_p = jnp.pad(w32.T.astype(compute_dtype),
                   ((0, K_pad - in_features), (0, N_pad - out_features)))
    scale_p = jnp.pad(scale, (0, N_pad - out_features)).reshape(1, N_pad)
    bias_p = jnp.pad(bias.astype(jnp.float32),
                     (0, N_pad - out_features)).reshape(1, N_pad)

    in_specs = [
        pl.BlockSpec((TB, TK), lambda i, j, k: (i, k)),   # x: (batch, K) tiled
        pl.BlockSpec((TK, TN), lambda i, j, k: (k, j)),   # W^T: (K, N) tiled
        pl.BlockSpec((1, TN), lambda i, j, k: (0, j)),    # scale: per-N tile
        pl.BlockSpec((1, TN), lambda i, j, k: (0, j)),    # bias : per-N tile
    ]
    out_spec = pl.BlockSpec((TB, TN), lambda i, j, k: (i, j))

    if n_k == 1:
        kernel = _fused_linear_kernel
        scratch = []
    else:
        kernel = _fused_linear_acc_kernel
        scratch = [pltpu.VMEM((TB, TN), jnp.float32)]

    vmem_limit = int(min(100 * 1024 * 1024,
                         max(2 * _vmem_est(TB, TK, TN), 16 * 1024 * 1024)))

    cost = pl.CostEstimate(
        flops=2 * B_pad * K_pad * N_pad,
        transcendentals=0,
        bytes_accessed=(B_pad * K_pad * c_item
                        + (B_pad // TB) * K_pad * N_pad * c_item
                        + B_pad * N_pad * o_item + 2 * N_pad * 4),
    )

    out = pl.pallas_call(
        kernel,
        out_shape=jax.ShapeDtypeStruct((B_pad, N_pad), out_dtype),
        grid=grid,
        in_specs=in_specs,
        out_specs=out_spec,
        scratch_shapes=scratch,
        compiler_params=pltpu.CompilerParams(
            dimension_semantics=("parallel", "parallel", "arbitrary"),
            vmem_limit_bytes=vmem_limit,
        ),
        cost_estimate=cost,
    )(x_p, wt_p, scale_p, bias_p)

    return out[:B, :out_features].reshape(*lead, out_features)


def _reference_forward(x, weight, bias, c):
    """Pure-JAX mirror of the PyTorch forward, for verification."""
    lip = stable_softplus(c.astype(jnp.float32).reshape(()))
    scale = jnp.minimum(lip / (jnp.sum(jnp.abs(weight), axis=1) + 1e-8), 1.0)
    w_eff = weight * scale[:, None]
    return x @ w_eff.T + bias


def _make_params(key, in_features, out_features):
    k_w, k_b = jax.random.split(key)
    # reset_parameters(): kaiming_uniform_(a=sqrt(5)) -> U(-1/sqrt(fan_in), 1/sqrt(fan_in))
    bound = 1.0 / math.sqrt(in_features)
    weight = jax.random.uniform(k_w, (out_features, in_features), jnp.float32,
                                minval=-bound, maxval=bound)
    bias = jax.random.uniform(k_b, (out_features,), jnp.float32,
                              minval=-bound, maxval=bound)
    # initialize_c(): c = logsumexp(|W|, dim=1).max()
    c = jnp.max(jax.scipy.special.logsumexp(jnp.abs(weight), axis=1)).reshape(1)
    return weight, bias, c


if __name__ == "__main__":
    key = jax.random.PRNGKey(0)
    k_p, k_x, k_x2, k_p2, k_x3 = jax.random.split(key, 5)

    # ---- small primary case: (2, 8, 32) -> (2, 8, 48), single-tile fast path ----
    in_features, out_features = 32, 48
    weight, bias, c = _make_params(k_p, in_features, out_features)
    x = jax.random.normal(k_x, (2, 8, in_features), jnp.float32)

    y = jax.block_until_ready(stable_softplus_lipschitz_linear(x, weight, bias, c))
    y_ref = _reference_forward(x.reshape(-1, in_features), weight, bias, c
                               ).reshape(2, 8, out_features)
    assert y.shape == (2, 8, out_features), y.shape
    assert jnp.allclose(y, y_ref, rtol=1e-4, atol=1e-5), (
        float(jnp.max(jnp.abs(y - y_ref))))

    # ---- larger ragged batch: exercises multi-tile batch grid + padding ----
    xb = jax.random.normal(k_x2, (1030, in_features), jnp.float32)
    yb = jax.block_until_ready(
        stable_softplus_lipschitz_linear(xb, weight, bias, c))
    yb_ref = _reference_forward(xb, weight, bias, c)
    assert yb.shape == (1030, out_features), yb.shape
    assert jnp.allclose(yb, yb_ref, rtol=1e-4, atol=1e-5), (
        float(jnp.max(jnp.abs(yb - yb_ref))))

    # ---- bf16 MXU operands with f32 accumulation (v6e/v7x fast path) ----
    yb16 = jax.block_until_ready(
        stable_softplus_lipschitz_linear(xb, weight, bias, c,
                                         compute_dtype=jnp.bfloat16))
    assert jnp.allclose(yb16, yb_ref, rtol=5e-2, atol=5e-2), (
        float(jnp.max(jnp.abs(yb16 - yb_ref))))

    # ---- wide-K case: exercises the K-tiled accumulator kernel path ----
    in2, out2 = 2560, 256
    w2, b2, c2 = _make_params(k_p2, in2, out2)
    x3 = jax.random.normal(k_x3, (64, in2), jnp.float32)
    y3 = jax.block_until_ready(stable_softplus_lipschitz_linear(x3, w2, b2, c2))
    y3_ref = _reference_forward(x3, w2, b2, c2)
    assert y3.shape == (64, out2), y3.shape
    assert jnp.allclose(y3, y3_ref, rtol=1e-3, atol=1e-3), (
        float(jnp.max(jnp.abs(y3 - y3_ref))))

    print("KERNEL_OK")
</pallas_src>

<mosaic_0001>
module attributes {stable_mosaic.version = 11 : i64} {
  func.func @_fused_linear_kernel(%arg0: i32, %arg1: i32, %arg2: i32, %arg3: memref<16x128xf32, #tpu.memory_space<vmem>>, %arg4: memref<128x128xf32, #tpu.memory_space<vmem>>, %arg5: memref<1x128xf32, #tpu.memory_space<vmem>>, %arg6: memref<1x128xf32, #tpu.memory_space<vmem>>, %arg7: memref<16x128xf32, #tpu.memory_space<vmem>>) attributes {dimension_semantics = [#tpu.dimension_semantics<parallel>, #tpu.dimension_semantics<parallel>, #tpu.dimension_semantics<arbitrary>], iteration_bounds = array<i64: 1, 1, 1>, scalar_prefetch = 0 : i64, scratch_operands = 0 : i64, tpu.core_type = #tpu.core_type<tc>, window_params = [{transform_indices = @transform_0, window_bounds = array<i64: 16, 128>}, {transform_indices = @transform_1, window_bounds = array<i64: 128, 128>}, {transform_indices = @transform_2, window_bounds = array<i64: 1, 128>}, {transform_indices = @transform_3, window_bounds = array<i64: 1, 128>}, {transform_indices = @transform_4, window_bounds = array<i64: 16, 128>}]} {
    %c0 = arith.constant 0 : index
    %c0_0 = arith.constant 0 : index
    %0 = vector.load %arg3[%c0, %c0_0] : memref<16x128xf32, #tpu.memory_space<vmem>>, vector<16x128xf32>
    %c0_1 = arith.constant 0 : index
    %c0_2 = arith.constant 0 : index
    %1 = vector.load %arg4[%c0_1, %c0_2] : memref<128x128xf32, #tpu.memory_space<vmem>>, vector<128x128xf32>
    %cst = arith.constant dense<0.000000e+00> : vector<16x128xf32>
    %2 = tpu.matmul %0, %1, %cst {dimension_numbers = #tpu.dot_dimension_numbers<[1], [0], [0], [1], [0, 0, 1, 1], [], []>} : vector<16x128xf32>, vector<128x128xf32>, vector<16x128xf32> -> vector<16x128xf32>
    %c0_3 = arith.constant 0 : index
    %c0_4 = arith.constant 0 : index
    %3 = vector.load %arg5[%c0_3, %c0_4] : memref<1x128xf32, #tpu.memory_space<vmem>>, vector<1x128xf32>
    %4 = vector.broadcast %3 : vector<1x128xf32> to vector<16x128xf32>
    %5 = arith.mulf %2, %4 : vector<16x128xf32>
    %c0_5 = arith.constant 0 : index
    %c0_6 = arith.constant 0 : index
    %6 = vector.load %arg6[%c0_5, %c0_6] : memref<1x128xf32, #tpu.memory_space<vmem>>, vector<1x128xf32>
    %7 = vector.broadcast %6 : vector<1x128xf32> to vector<16x128xf32>
    %8 = arith.addf %5, %7 : vector<16x128xf32>
    %c0_7 = arith.constant 0 : index
    %c0_8 = arith.constant 0 : index
    %9 = vector.load %arg7[%c0_7, %c0_8] : memref<16x128xf32, #tpu.memory_space<vmem>>, vector<16x128xf32>
    tpu.vector_store %arg7[%c0_7, %c0_8], %8 {strides = array<i32>} : memref<16x128xf32, #tpu.memory_space<vmem>>, vector<16x128xf32>,
    return
  }
  func.func @transform_0(%arg0: i32, %arg1: i32, %arg2: i32) -> (i32, i32) {
    %c0_i32 = arith.constant 0 : i32
    return %arg0, %arg2 : i32, i32
  }
  func.func @transform_1(%arg0: i32, %arg1: i32, %arg2: i32) -> (i32, i32) {
    %c0_i32 = arith.constant 0 : i32
    return %arg2, %arg1 : i32, i32
  }
  func.func @transform_2(%arg0: i32, %arg1: i32, %arg2: i32) -> (i32, i32) {
    %c0_i32 = arith.constant 0 : i32
    %c0_i32_0 = arith.constant 0 : i32
    return %c0_i32, %arg1 : i32, i32
  }
  func.func @transform_3(%arg0: i32, %arg1: i32, %arg2: i32) -> (i32, i32) {
    %c0_i32 = arith.constant 0 : i32
    %c0_i32_0 = arith.constant 0 : i32
    return %c0_i32, %arg1 : i32, i32
  }
  func.func @transform_4(%arg0: i32, %arg1: i32, %arg2: i32) -> (i32, i32) {
    %c0_i32 = arith.constant 0 : i32
    return %arg0, %arg1 : i32, i32
  }
}

</mosaic_0001>

<llo_original>
// kernel: stable_softplus_lipschitz_linear.1
$region0: #{stable_softplus_lipschitz_linear.1}
  #allocation0 [shape = 'u32[]', space=smem, size = 0x4, offset = 0x4, fixed_abs, tag = 'smem constant byte address 0x4 - core index']
  #allocation1 [shape = 'u32[144,128]{1,0:T(1,128)}', space=vmem, size = 0x12000, scoped, tag = 'internal scratch']
  %s0 = inlined_call_operand.vmem [shape: f32[16,128], index: 0, kind: input, shape index: {}]
  %s1 = inlined_call_operand.vmem [shape: f32[128,128], index: 1, kind: input, shape index: {}]
  %s2 = inlined_call_operand.vmem [shape: f32[1,128], index: 2, kind: input, shape index: {}]
  %s3 = inlined_call_operand.vmem [shape: f32[1,128], index: 3, kind: input, shape index: {}]
  %s4 = inlined_call_operand.vmem [shape: f32[16,128], index: 4, kind: output, shape index: {}]
  %s5 = sld [smem:[#allocation0]]
  $region26: #{stable_softplus_lipschitz_linear.1} parent=0
    _
  %s7 = ssub.s32 1, %s5
  %s8 = scalar_select 0, %s7, %s5
  // Predicated region
  $region2: #{stable_softplus_lipschitz_linear.1} parent=0 // pred_check
    _
  $region3: #{stable_softplus_lipschitz_linear.1} parent=0 // pred_check_branch
    %10 = sbr.rel (0) target = $region5
  $region4: #{stable_softplus_lipschitz_linear.1} parent=0 // pred_region
    _
  $region5: #{stable_softplus_lipschitz_linear.1} parent=0 // pred_fallthru
    _
  // Predicated region
  $region6: #{stable_softplus_lipschitz_linear.1} parent=0 // pred_check
    _
  $region7: #{stable_softplus_lipschitz_linear.1} parent=0 // pred_check_branch
    %12 = sbr.rel (0) target = $region9
  $region8: #{stable_softplus_lipschitz_linear.1} parent=0 // pred_region
    _
  $region9: #{stable_softplus_lipschitz_linear.1} parent=0 // pred_fallthru
    _
  // Predicated region
  $region10: #{stable_softplus_lipschitz_linear.1} parent=0 // pred_check
    _
  $region11: #{stable_softplus_lipschitz_linear.1} parent=0 // pred_check_branch
    %14 = sbr.rel (0) target = $region13
  $region12: #{stable_softplus_lipschitz_linear.1} parent=0 // pred_region
    _
  $region13: #{stable_softplus_lipschitz_linear.1} parent=0 // pred_fallthru
    _
  // Predicated region
  $region14: #{stable_softplus_lipschitz_linear.1} parent=0 // pred_check
    _
  $region15: #{stable_softplus_lipschitz_linear.1} parent=0 // pred_check_branch
    %16 = sbr.rel (0) target = $region17
  $region16: #{stable_softplus_lipschitz_linear.1} parent=0 // pred_region
    _
  $region17: #{stable_softplus_lipschitz_linear.1} parent=0 // pred_fallthru
    _
  %v17 = vld [vmem:[%s0] sm:$0xff]
  %v18 = vld [vmem:[%s0 + $0x8] sm:$0xff]
  %v19 = vld [vmem:[%s1] sm:$0xff]
  %v20 = vld [vmem:[%s1 + $0x8] sm:$0xff]
  %v21 = vld [vmem:[%s1 + $0x10] sm:$0xff]
  %v22 = vld [vmem:[%s1 + $0x18] sm:$0xff]
  %v23 = vld [vmem:[%s1 + $0x20] sm:$0xff]
  %v24 = vld [vmem:[%s1 + $0x28] sm:$0xff]
  %v25 = vld [vmem:[%s1 + $0x30] sm:$0xff]
  %v26 = vld [vmem:[%s1 + $0x38] sm:$0xff]
  %v27 = vld [vmem:[%s1 + $0x40] sm:$0xff]
  %v28 = vld [vmem:[%s1 + $0x48] sm:$0xff]
  %v29 = vld [vmem:[%s1 + $0x50] sm:$0xff]
  %v30 = vld [vmem:[%s1 + $0x58] sm:$0xff]
  %v31 = vld [vmem:[%s1 + $0x60] sm:$0xff]
  %v32 = vld [vmem:[%s1 + $0x68] sm:$0xff]
  %v33 = vld [vmem:[%s1 + $0x70] sm:$0xff]
  %v34 = vld [vmem:[%s1 + $0x78] sm:$0xff]
  %35 = vmatprep.subr.mxu0 0.0
  %36 = vmatpush1.msra.mxu0 %v19
  %37 = vmatprep.subr.mxu0 0.0
  %38 = vmatpush1.msra.mxu0 %v20
  %39 = vmatprep.subr.mxu0 0.0
  %40 = vmatpush1.msra.mxu0 %v21
  %41 = vmatprep.subr.mxu0 0.0
  %42 = vmatpush1.msra.mxu0 %v22
  %43 = vmatprep.subr.mxu0 0.0
  %44 = vmatpush1.msra.mxu0 %v23
  %45 = vmatprep.subr.mxu0 0.0
  %46 = vmatpush1.msra.mxu0 %v24
  %47 = vmatprep.subr.mxu0 0.0
  %48 = vmatpush1.msra.mxu0 %v25
  %49 = vmatprep.subr.mxu0 0.0
  %50 = vmatpush1.msra.mxu0 %v26
  %51 = vmatprep.subr.mxu0 0.0
  %52 = vmatpush1.msra.mxu0 %v27
  %53 = vmatprep.subr.mxu0 0.0
  %54 = vmatpush1.msra.mxu0 %v28
  %55 = vmatprep.subr.mxu0 0.0
  %56 = vmatpush1.msra.mxu0 %v29
  %57 = vmatprep.subr.mxu0 0.0
  %58 = vmatpush1.msra.mxu0 %v30
  %59 = vmatprep.subr.mxu0 0.0
  %60 = vmatpush1.msra.mxu0 %v31
  %61 = vmatprep.subr.mxu0 0.0
  %62 = vmatpush1.msra.mxu0 %v32
  %63 = vmatprep.subr.mxu0 0.0
  %64 = vmatpush1.msra.mxu0 %v33
  %65 = vmatprep.subr.mxu0 0.0
  %66 = vmatpush1.msra.mxu0 %v34
  %67 = vmatprep.subr.mxu0 0.0
  %68 = vmatpush1.msra.mxu0 0.0
  %69 = vmatprep.subr.mxu0 0.0
  %70 = vmatpush1.msra.mxu0 0.0
  %71 = vmatprep.subr.mxu0 0.0
  %72 = vmatpush1.msra.mxu0 0.0
  %73 = vmatprep.subr.mxu0 0.0
  %74 = vmatpush1.msra.mxu0 0.0
  %75 = vmatprep.subr.mxu0 0.0
  %76 = vmatpush1.msra.mxu0 0.0
  %77 = vmatprep.subr.mxu0 0.0
  %78 = vmatpush1.msra.mxu0 0.0
  %79 = vmatprep.subr.mxu0 0.0
  %80 = vmatpush1.msra.mxu0 0.0
  %81 = vmatprep.subr.mxu0 0.0
  %82 = vmatpush1.msra.mxu0 0.0
  %83 = vmatprep.subr.mxu0 0.0
  %84 = vmatpush1.msra.mxu0 0.0
  %85 = vmatprep.subr.mxu0 0.0
  %86 = vmatpush1.msra.mxu0 0.0
  %87 = vmatprep.subr.mxu0 0.0
  %88 = vmatpush1.msra.mxu0 0.0
  %89 = vmatprep.subr.mxu0 0.0
  %90 = vmatpush1.msra.mxu0 0.0
  %91 = vmatprep.subr.mxu0 0.0
  %92 = vmatpush1.msra.mxu0 0.0
  %93 = vmatprep.subr.mxu0 0.0
  %94 = vmatpush1.msra.mxu0 0.0
  %95 = vmatprep.subr.mxu0 0.0
  %96 = vmatpush1.msra.mxu0 0.0
  %97 = vmatprep.subr.mxu0 0.0
  %98 = vmatpush1.msra.mxu0 0.0
  %99 = vmatprep.mubr.f32.mxu0 0.0
  %100 = vmatmul.mubr.f32.gmra.mrb[0].mxu0 %v17
  %v101 = vpop.f32.mrb[0].mxu0
  %v102 = vadd.f32 0.0, %v101
  %v103 = vpop.f32.mrb[0].mxu0
  %104 = vmatprep.mubr.f32.mxu0 0.0
  %105 = vmatmul.mubr.f32.gmra.mrb[0].mxu0 %v18
  %v106 = vpop.f32.mrb[0].mxu0
  %v107 = vadd.f32 0.0, %v106
  %v108 = vpop.f32.mrb[0].mxu0
  %109 = vdwg.mxu0
  %v110 = vld [vmem:[%s2] sm:$0x1]
  %v112 = vlaneseq
  %v113 = vshrl.u32 %v112, 7
  %v114 = vsub.s32 0, %v113
  %v115 = vrot.slane %v110, %v114
  %v117 = vmul.f32 %v102, %v115
  %v118 = vmul.f32 %v107, %v115
  %v119 = vld [vmem:[%s3] sm:$0x1]
  %v121 = vlaneseq
  %v122 = vshrl.u32 %v121, 7
  %v123 = vsub.s32 0, %v122
  %v124 = vrot.slane %v119, %v123
  %v126 = vadd.f32 %v117, %v124
  %v127 = vadd.f32 %v118, %v124
  %128 = vst [vmem:[%s4] sm:$0xff] %v126
  %129 = vst [vmem:[%s4 + $0x8] sm:$0xff] %v127
  // Predicated region
  $region18: #{stable_softplus_lipschitz_linear.1} parent=0 // pred_check
    _
  $region19: #{stable_softplus_lipschitz_linear.1} parent=0 // pred_check_branch
    %131 = sbr.rel (0) target = $region21
  $region20: #{stable_softplus_lipschitz_linear.1} parent=0 // pred_region
    _
  $region21: #{stable_softplus_lipschitz_linear.1} parent=0 // pred_fallthru
    _
  // Predicated region
  $region22: #{stable_softplus_lipschitz_linear.1} parent=0 // pred_check
    _
  $region23: #{stable_softplus_lipschitz_linear.1} parent=0 // pred_check_branch
    %133 = sbr.rel (0) target = $region25
  $region24: #{stable_softplus_lipschitz_linear.1} parent=0 // pred_region
    _
  $region25: #{stable_softplus_lipschitz_linear.1} parent=0 // pred_fallthru
    _

</llo_original>
